<compile_context>
chip_gen: v5e
topology: v5e:2x2
jax: 0.10.0
libtpu: 0.0.40
codegen_flags: <defaults>
</compile_context>

<pallas_src>
import jax
import jax.numpy as jnp
from jax import lax
from jax.experimental import pallas as pl
from jax.experimental.pallas import tpu as pltpu

# Problem sizes (small, consistent with Conv2d(3, 5, 3)).
N, CIN, H, W = 2, 3, 16, 16
COUT, KH, KW = 5, 3, 3
OH, OW = H - KH + 1, W - KW + 1
K = CIN * KH * KW                    # 27 contraction taps
KPAD = 32                            # contraction taps padded (zeros past K)
CPAD = 8                             # output channels padded to a full vreg sublane set
P = N * OH * OW                      # 392 real output pixels
PPAD = ((P + 127) // 128) * 128      # 512 -> lane-dense padded pixel count
EPS = 1e-5


def conv_bn_kernel(patches_ref, params_ref, o_ref):
    """Fused Conv2d (im2col matmul on the MXU) + BatchNorm2d (batch stats).

    patches_ref: VMEM (KPAD, PPAD)     f32 -- im2col'd input, zero past row K / col P
    params_ref:  VMEM (CPAD, KPAD + 2) f32 -- [:, :K] conv weights (CIN,KH,KW flat),
                                              [:, KPAD] gamma, [:, KPAD+1] beta,
                                              zero elsewhere (incl. padded channels)
    o_ref:       VMEM (CPAD, PPAD)     f32 -- lane-dense, channel-major output
    """
    w = params_ref[:, :KPAD]                         # (CPAD, KPAD)
    gamma = params_ref[:, KPAD:KPAD + 1]             # (CPAD, 1)
    beta = params_ref[:, KPAD + 1:KPAD + 2]          # (CPAD, 1)

    # Whole convolution contraction as one MXU matmul (padded taps are zero
    # on both operands, padded channels have zero weights).
    conv = jnp.dot(w, patches_ref[...],
                   preferred_element_type=jnp.float32)           # (CPAD, PPAD)

    # BatchNorm2d, training mode: biased statistics over the P real pixels.
    # Padded lanes [P:PPAD] of conv are exactly zero (zero patch columns), so
    # they add 0 to the mean sum; for the variance we use centered values
    # (numerically robust) and subtract the padded lanes' exact contribution
    # (PPAD - P) * mean^2 as a per-channel scalar.
    inv_cnt = 1.0 / float(P)
    mean = jnp.sum(conv, axis=-1, keepdims=True) * inv_cnt        # (CPAD, 1)
    centered = conv - mean                                        # (CPAD, PPAD)
    ssq = jnp.sum(centered * centered, axis=-1, keepdims=True)    # (CPAD, 1)
    var = (ssq - float(PPAD - P) * mean * mean) * inv_cnt
    scale = gamma * lax.rsqrt(var + EPS)                          # (CPAD, 1)
    # NOTE: conv bias cancels exactly under mean-centering, so it is omitted.
    # Output write: single mul + add pass. Padded lanes hold -mean*scale+beta
    # (sliced away by the wrapper); padded channels hold 0 (gamma/beta = 0).
    o_ref[...] = centered * scale + beta


@jax.jit
def conv_bn(x, w, b, gamma, beta):
    del b  # conv bias cancels under BatchNorm mean-centering (see kernel note)

    # --- layout plumbing (all fused under this jit, no eager dispatches) ---
    # im2col via ONE conv with an identity kernel:
    #   patches[n, k, oh, ow] = x[n, k//(KH*KW), oh + (k//KW)%KH, ow + k%KW]
    eye = jnp.eye(K, dtype=x.dtype).reshape(K, CIN, KH, KW)
    pat = lax.conv_general_dilated(
        x, eye, window_strides=(1, 1), padding="VALID",
        dimension_numbers=("NCHW", "OIHW", "NCHW"))               # (N, K, OH, OW)
    pat = jnp.transpose(pat, (1, 0, 2, 3)).reshape(K, P)          # (K, P)
    patches = jnp.pad(pat, ((0, KPAD - K), (0, PPAD - P)))        # (KPAD, PPAD)

    # Pack conv weights + gamma + beta into one params array (2 inputs total).
    w_mat = w.reshape(COUT, K)          # flattens (CIN,KH,KW) in the same order
    params = jnp.concatenate(
        [w_mat,
         jnp.zeros((COUT, KPAD - K), jnp.float32),
         gamma.reshape(COUT, 1),
         beta.reshape(COUT, 1)], axis=1)                          # (COUT, KPAD+2)
    params = jnp.pad(params, ((0, CPAD - COUT), (0, 0)))          # (CPAD, KPAD+2)

    # Single ungridded call, full-array blocks; everything fits in VMEM with
    # huge margin on v5e/v6e/v7x. (If N/H/W ever grow, add a grid over the
    # lane/pixel axis in >=512-wide blocks with dimension_semantics=
    # ("parallel",) so v7x's two TensorCores split the tiles.)
    out_flat = pl.pallas_call(
        conv_bn_kernel,
        out_shape=jax.ShapeDtypeStruct((CPAD, PPAD), jnp.float32),
        in_specs=[
            pl.BlockSpec(memory_space=pltpu.MemorySpace.VMEM),    # patches
            pl.BlockSpec(memory_space=pltpu.MemorySpace.VMEM),    # packed params
        ],
        out_specs=pl.BlockSpec(memory_space=pltpu.MemorySpace.VMEM),
        cost_estimate=pl.CostEstimate(
            flops=2 * CPAD * KPAD * PPAD,
            transcendentals=CPAD,
            bytes_accessed=4 * (KPAD * PPAD + CPAD * (KPAD + 2) + CPAD * PPAD)),
    )(patches, params)

    # Back to NCHW for the caller (still inside the jit).
    out = out_flat[:COUT, :P].reshape(COUT, N, OH, OW)
    return jnp.transpose(out, (1, 0, 2, 3))


def ref_forward(x, w, b, gamma, beta):
    """Pure-JAX reference (lax conv + manual training-mode batch norm)."""
    conv = lax.conv_general_dilated(
        x, w, window_strides=(1, 1), padding="VALID",
        dimension_numbers=("NCHW", "OIHW", "NCHW"))
    conv = conv + b[None, :, None, None]
    mean = conv.mean(axis=(0, 2, 3), keepdims=True)
    var = ((conv - mean) ** 2).mean(axis=(0, 2, 3), keepdims=True)
    xn = (conv - mean) * lax.rsqrt(var + EPS)
    return xn * gamma[None, :, None, None] + beta[None, :, None, None]


if __name__ == "__main__":
    key = jax.random.PRNGKey(0)
    kx, kw, kb = jax.random.split(key, 3)

    # Deterministic parameter init (shapes from Conv2d(3, 5, 3) / BatchNorm2d(5)).
    fan_in = CIN * KH * KW
    bound = 1.0 / (fan_in ** 0.5)
    w = jax.random.uniform(kw, (COUT, CIN, KH, KW), jnp.float32, -bound, bound)
    b = jax.random.uniform(kb, (COUT,), jnp.float32, -bound, bound)
    gamma = jnp.ones((COUT,), jnp.float32)   # BatchNorm default affine init
    beta = jnp.zeros((COUT,), jnp.float32)

    x = jax.random.normal(kx, (N, CIN, H, W), jnp.float32)

    out = conv_bn(x, w, b, gamma, beta)
    out = jax.block_until_ready(out)

    expected = ref_forward(x, w, b, gamma, beta)
    assert out.shape == (N, COUT, OH, OW), out.shape
    assert jnp.allclose(out, expected, rtol=1e-4, atol=1e-4), (
        float(jnp.max(jnp.abs(out - expected))))

    print("KERNEL_OK")
</pallas_src>

<mosaic_0001>
module attributes {stable_mosaic.version = 11 : i64} {
  func.func @conv_bn_kernel(%arg0: memref<32x512xf32, #tpu.memory_space<vmem>>, %arg1: memref<8x34xf32, #tpu.memory_space<vmem>>, %arg2: memref<8x512xf32, #tpu.memory_space<vmem>>) attributes {dimension_semantics = [], scalar_prefetch = 0 : i64, scratch_operands = 0 : i64, tpu.core_type = #tpu.core_type<tc>} {
    %c0 = arith.constant 0 : index
    %c0_0 = arith.constant 0 : index
    %0 = vector.load %arg1[%c0, %c0_0] : memref<8x34xf32, #tpu.memory_space<vmem>>, vector<8x32xf32>
    %c0_1 = arith.constant 0 : index
    %c32 = arith.constant 32 : index
    %1 = vector.load %arg1[%c0_1, %c32] : memref<8x34xf32, #tpu.memory_space<vmem>>, vector<8x1xf32>
    %c0_2 = arith.constant 0 : index
    %c33 = arith.constant 33 : index
    %2 = vector.load %arg1[%c0_2, %c33] : memref<8x34xf32, #tpu.memory_space<vmem>>, vector<8x1xf32>
    %c0_3 = arith.constant 0 : index
    %c0_4 = arith.constant 0 : index
    %3 = vector.load %arg0[%c0_3, %c0_4] : memref<32x512xf32, #tpu.memory_space<vmem>>, vector<32x512xf32>
    %cst = arith.constant dense<0.000000e+00> : vector<8x512xf32>
    %4 = tpu.matmul %0, %3, %cst {dimension_numbers = #tpu.dot_dimension_numbers<[1], [0], [0], [1], [0, 0, 1, 1], [], []>} : vector<8x32xf32>, vector<32x512xf32>, vector<8x512xf32> -> vector<8x512xf32>
    %cst_5 = arith.constant dense<0.000000e+00> : vector<8xf32>
    %5 = vector.multi_reduction <add>, %4, %cst_5 [1] : vector<8x512xf32> to vector<8xf32>
    %6 = vector.shape_cast %5 : vector<8xf32> to vector<8x1xf32>
    %cst_6 = arith.constant 0.00255102036 : f32
    %7 = vector.broadcast %cst_6 : f32 to vector<8x1xf32>
    %8 = arith.mulf %6, %7 : vector<8x1xf32>
    %9 = vector.broadcast %8 : vector<8x1xf32> to vector<8x512xf32>
    %10 = arith.subf %4, %9 : vector<8x512xf32>
    %11 = arith.mulf %10, %10 : vector<8x512xf32>
    %cst_7 = arith.constant dense<0.000000e+00> : vector<8xf32>
    %12 = vector.multi_reduction <add>, %11, %cst_7 [1] : vector<8x512xf32> to vector<8xf32>
    %13 = vector.shape_cast %12 : vector<8xf32> to vector<8x1xf32>
    %cst_8 = arith.constant 1.200000e+02 : f32
    %14 = vector.broadcast %cst_8 : f32 to vector<8x1xf32>
    %15 = arith.mulf %14, %8 : vector<8x1xf32>
    %16 = arith.mulf %15, %8 : vector<8x1xf32>
    %17 = arith.subf %13, %16 : vector<8x1xf32>
    %cst_9 = arith.constant 0.00255102036 : f32
    %18 = vector.broadcast %cst_9 : f32 to vector<8x1xf32>
    %19 = arith.mulf %17, %18 : vector<8x1xf32>
    %cst_10 = arith.constant 9.99999974E-6 : f32
    %20 = vector.broadcast %cst_10 : f32 to vector<8x1xf32>
    %21 = arith.addf %19, %20 : vector<8x1xf32>
    %22 = math.rsqrt %21 : vector<8x1xf32>
    %23 = arith.mulf %1, %22 : vector<8x1xf32>
    %24 = vector.broadcast %23 : vector<8x1xf32> to vector<8x512xf32>
    %25 = arith.mulf %10, %24 : vector<8x512xf32>
    %26 = vector.broadcast %2 : vector<8x1xf32> to vector<8x512xf32>
    %27 = arith.addf %25, %26 : vector<8x512xf32>
    %c0_11 = arith.constant 0 : index
    %c0_12 = arith.constant 0 : index
    %28 = vector.load %arg2[%c0_11, %c0_12] : memref<8x512xf32, #tpu.memory_space<vmem>>, vector<8x512xf32>
    tpu.vector_store %arg2[%c0_11, %c0_12], %27 {strides = array<i32>} : memref<8x512xf32, #tpu.memory_space<vmem>>, vector<8x512xf32>,
    return
  }
}

</mosaic_0001>

<llo_original>
// kernel: conv_bn.1
$region0: #{conv_bn.1}
  #allocation0 [shape = 'u32[]', space=smem, size = 0x4, offset = 0x4, fixed_abs, tag = 'smem constant byte address 0x4 - core index']
  #allocation1 [shape = 'u32[72,128]{1,0:T(1,128)}', space=vmem, size = 0x9000, scoped, tag = 'internal scratch']
  %s0 = inlined_call_operand.vmem [shape: f32[32,512], index: 0, kind: input, shape index: {}]
  %s1 = inlined_call_operand.vmem [shape: f32[8,34], index: 1, kind: input, shape index: {}]
  %s2 = inlined_call_operand.vmem [shape: f32[8,512], index: 2, kind: output, shape index: {}]
  %s3 = sld [smem:[#allocation0]]
  $region18: #{conv_bn.1} parent=0
    _
  %s5 = ssub.s32 1, %s3
  %s6 = scalar_select 0, %s5, %s3
  // Predicated region
  $region2: #{conv_bn.1} parent=0 // pred_check
    _
  $region3: #{conv_bn.1} parent=0 // pred_check_branch
    %8 = sbr.rel (0) target = $region5
  $region4: #{conv_bn.1} parent=0 // pred_region
    _
  $region5: #{conv_bn.1} parent=0 // pred_fallthru
    _
  // Predicated region
  $region6: #{conv_bn.1} parent=0 // pred_check
    _
  $region7: #{conv_bn.1} parent=0 // pred_check_branch
    %10 = sbr.rel (0) target = $region9
  $region8: #{conv_bn.1} parent=0 // pred_region
    _
  $region9: #{conv_bn.1} parent=0 // pred_fallthru
    _
  %v11 = vld [vmem:[%s1] sm:$0xff]
  %v12 = vld [vmem:[%s0] sm:$0xff]
  %v13 = vld [vmem:[%s0 + $0x8] sm:$0xff]
  %v14 = vld [vmem:[%s0 + $0x10] sm:$0xff]
  %v15 = vld [vmem:[%s0 + $0x18] sm:$0xff]
  %v16 = vld [vmem:[%s0 + $0x20] sm:$0xff]
  %v17 = vld [vmem:[%s0 + $0x28] sm:$0xff]
  %v18 = vld [vmem:[%s0 + $0x30] sm:$0xff]
  %v19 = vld [vmem:[%s0 + $0x38] sm:$0xff]
  %v20 = vld [vmem:[%s0 + $0x40] sm:$0xff]
  %v21 = vld [vmem:[%s0 + $0x48] sm:$0xff]
  %v22 = vld [vmem:[%s0 + $0x50] sm:$0xff]
  %v23 = vld [vmem:[%s0 + $0x58] sm:$0xff]
  %v24 = vld [vmem:[%s0 + $0x60] sm:$0xff]
  %v25 = vld [vmem:[%s0 + $0x68] sm:$0xff]
  %v26 = vld [vmem:[%s0 + $0x70] sm:$0xff]
  %v27 = vld [vmem:[%s0 + $0x78] sm:$0xff]
  %vm28 = vcmask 261120
  %v30 = vsel %vm28, %v11, 0
  %32 = vmatpush.msra.mxu0 0.0
  %33 = vmatpush.msra.mxu0 0.0
  %34 = vmatpush.msra.mxu0 0.0
  %35 = vmatpush.msra.mxu0 0.0
  %36 = vmatpush.msra.mxu0 0.0
  %37 = vmatpush.msra.mxu0 0.0
  %38 = vmatpush.msra.mxu0 0.0
  %39 = vmatpush.msra.mxu0 0.0
  %40 = vmatpush.msra.mxu0 0.0
  %41 = vmatpush.msra.mxu0 0.0
  %42 = vmatpush.msra.mxu0 0.0
  %43 = vmatpush.msra.mxu0 0.0
  %44 = vmatpush.msra.mxu0 %v24
  %45 = vmatpush.msra.mxu0 %v20
  %46 = vmatpush.msra.mxu0 %v16
  %47 = vmatpush.msra.mxu0 %v12
  %48 = vmatmul.f32.gmra.mxu0 %v30
  %v49 = vpop.f32.mrf.mxu0
  %v50 = vadd.f32 0.0, %v49
  %51 = vdwg.mxu0
  %52 = vmatpush.msra.mxu0 0.0
  %53 = vmatpush.msra.mxu0 0.0
  %54 = vmatpush.msra.mxu0 0.0
  %55 = vmatpush.msra.mxu0 0.0
  %56 = vmatpush.msra.mxu0 0.0
  %57 = vmatpush.msra.mxu0 0.0
  %58 = vmatpush.msra.mxu0 0.0
  %59 = vmatpush.msra.mxu0 0.0
  %60 = vmatpush.msra.mxu0 0.0
  %61 = vmatpush.msra.mxu0 0.0
  %62 = vmatpush.msra.mxu0 0.0
  %63 = vmatpush.msra.mxu0 0.0
  %64 = vmatpush.msra.mxu0 %v25
  %65 = vmatpush.msra.mxu0 %v21
  %66 = vmatpush.msra.mxu0 %v17
  %67 = vmatpush.msra.mxu0 %v13
  %68 = vmatmul.f32.gmra.mxu0 %v30
  %v69 = vpop.f32.mrf.mxu0
  %v70 = vadd.f32 0.0, %v69
  %71 = vdwg.mxu0
  %72 = vmatpush.msra.mxu0 0.0
  %73 = vmatpush.msra.mxu0 0.0
  %74 = vmatpush.msra.mxu0 0.0
  %75 = vmatpush.msra.mxu0 0.0
  %76 = vmatpush.msra.mxu0 0.0
  %77 = vmatpush.msra.mxu0 0.0
  %78 = vmatpush.msra.mxu0 0.0
  %79 = vmatpush.msra.mxu0 0.0
  %80 = vmatpush.msra.mxu0 0.0
  %81 = vmatpush.msra.mxu0 0.0
  %82 = vmatpush.msra.mxu0 0.0
  %83 = vmatpush.msra.mxu0 0.0
  %84 = vmatpush.msra.mxu0 %v26
  %85 = vmatpush.msra.mxu0 %v22
  %86 = vmatpush.msra.mxu0 %v18
  %87 = vmatpush.msra.mxu0 %v14
  %88 = vmatmul.f32.gmra.mxu0 %v30
  %v89 = vpop.f32.mrf.mxu0
  %v90 = vadd.f32 0.0, %v89
  %91 = vdwg.mxu0
  %92 = vmatpush.msra.mxu0 0.0
  %93 = vmatpush.msra.mxu0 0.0
  %94 = vmatpush.msra.mxu0 0.0
  %95 = vmatpush.msra.mxu0 0.0
  %96 = vmatpush.msra.mxu0 0.0
  %97 = vmatpush.msra.mxu0 0.0
  %98 = vmatpush.msra.mxu0 0.0
  %99 = vmatpush.msra.mxu0 0.0
  %100 = vmatpush.msra.mxu0 0.0
  %101 = vmatpush.msra.mxu0 0.0
  %102 = vmatpush.msra.mxu0 0.0
  %103 = vmatpush.msra.mxu0 0.0
  %104 = vmatpush.msra.mxu0 %v27
  %105 = vmatpush.msra.mxu0 %v23
  %106 = vmatpush.msra.mxu0 %v19
  %107 = vmatpush.msra.mxu0 %v15
  %108 = vmatmul.f32.gmra.mxu0 %v30
  %v109 = vpop.f32.mrf.mxu0
  %v110 = vadd.f32 0.0, %v109
  %111 = vdwg.mxu0
  %v112 = vadd.f32 %v50, %v70
  %v113 = vadd.f32 %v112, %v90
  %v114 = vadd.f32 %v113, %v110
  %115 = vadd.xlane.f32.xlu0 %v114
  %v116 = vpop.xlane.xlu0 %115
  %v117 = vmul.f32 %v116, 0.0025510204
  %v118 = vsub.f32 %v50, %v117
  %v119 = vsub.f32 %v70, %v117
  %v120 = vsub.f32 %v90, %v117
  %v121 = vsub.f32 %v110, %v117
  %v122 = vmul.f32 %v118, %v118
  %v123 = vmul.f32 %v119, %v119
  %v124 = vmul.f32 %v120, %v120
  %v125 = vmul.f32 %v121, %v121
  %v126 = vadd.f32 %v122, %v123
  %v127 = vadd.f32 %v126, %v124
  %v128 = vadd.f32 %v127, %v125
  %129 = vadd.xlane.f32.xlu0 %v128
  %v130 = vpop.xlane.xlu0 %129
  %v131 = vmul.f32 %v117, 120.0
  %v132 = vmul.f32 %v131, %v117
  %v133 = vsub.f32 %v130, %v132
  %v134 = vmul.f32 %v133, 0.0025510204
  %v135 = vadd.f32 %v134, 1e-05
  %v136 = vrsqrt.pop %v135
  %v137 = vmul.f32 %v136, %v135
  %v138 = vmul.f32 %v137, %v136
  %v139 = vmul.f32 0.5, %v138
  %v140 = vsub.f32 1.5, %v139
  %v141 = vmul.f32 %v136, %v140
  %vm142 = vweird.f32 %v135
  %vm143 = vweird.f32 %v136
  %vm144 = vmor %vm142, %vm143
  %v145 = vsel %vm144, %v136, %v141
  %v146 = vmul.f32 %v11, %v145
  %148 = vset.pattern.permute.xlu0 32
  %149 = vperm.xlu0 %148, %v146
  %v150 = vpop.permute.xlu0 %149
  %v152 = vmul.f32 %v118, %v150
  %v153 = vmul.f32 %v119, %v150
  %v154 = vmul.f32 %v120, %v150
  %v155 = vmul.f32 %v121, %v150
  %156 = vset.pattern.permute.xlu0 33
  %157 = vperm.xlu0 %156, %v11
  %v158 = vpop.permute.xlu0 %157
  %v160 = vadd.f32 %v152, %v158
  %v161 = vadd.f32 %v153, %v158
  %v162 = vadd.f32 %v154, %v158
  %v163 = vadd.f32 %v155, %v158
  %164 = vst [vmem:[%s2] sm:$0xff] %v160
  %165 = vst [vmem:[%s2 + $0x8] sm:$0xff] %v161
  %166 = vst [vmem:[%s2 + $0x10] sm:$0xff] %v162
  %167 = vst [vmem:[%s2 + $0x18] sm:$0xff] %v163
  // Predicated region
  $region10: #{conv_bn.1} parent=0 // pred_check
    _
  $region11: #{conv_bn.1} parent=0 // pred_check_branch
    %169 = sbr.rel (0) target = $region13
  $region12: #{conv_bn.1} parent=0 // pred_region
    _
  $region13: #{conv_bn.1} parent=0 // pred_fallthru
    _
  // Predicated region
  $region14: #{conv_bn.1} parent=0 // pred_check
    _
  $region15: #{conv_bn.1} parent=0 // pred_check_branch
    %171 = sbr.rel (0) target = $region17
  $region16: #{conv_bn.1} parent=0 // pred_region
    _
  $region17: #{conv_bn.1} parent=0 // pred_fallthru
    _

</llo_original>
